<compile_context>
chip_gen: v7x
topology: tpu7x:2x2x1
jax: 0.10.0
libtpu: 0.0.40
codegen_flags: <defaults>
</compile_context>

<pallas_src>
import functools

import jax
import jax.numpy as jnp
from jax.experimental import pallas as pl
from jax.experimental.pallas import tpu as pltpu

_MIB = 1024 * 1024


def _round_up(x, m):
    return ((x + m - 1) // m) * m


def _vmem_capacity_bytes():
    try:
        return int(pltpu.get_tpu_info().vmem_capacity_bytes)
    except Exception:
        return 64 * _MIB  # conservative: v7x per-TensorCore VMEM


def _linear_kernel(x_ref, w_ref, b_ref, o_ref, *, single_k):
    """One (tm, tn) output tile of y = x @ W + b (W already transposed)."""
    if single_k:
        # Whole reduction in one block: fused dot + bias, single store.
        o_ref[...] = (
            jnp.dot(x_ref[...], w_ref[...], preferred_element_type=jnp.float32)
            + b_ref[...]
        ).astype(o_ref.dtype)
        return

    k = pl.program_id(2)
    part = jnp.dot(x_ref[...], w_ref[...], preferred_element_type=jnp.float32)

    @pl.when(k == 0)
    def _():
        o_ref[...] = part            # overwrite: no zero-init pass, no scratch

    @pl.when(k > 0)
    def _():
        o_ref[...] += part           # accumulate directly into f32 output block

    @pl.when(k == pl.num_programs(2) - 1)
    def _():
        o_ref[...] += b_ref[...]


def prepare_classifier_1_params(weight, bias, param_dtype=jnp.float32):
    """One-time parameter prep (NOT in the per-call hot path).

    weight: [out_dim, in_dim] (PyTorch nn.Linear layout); bias: [out_dim].
    Returns:
      w_p: [in_dim, Np]  transposed, N zero-padded to a multiple of 128
                         (lane-dense output -> no masked partial stores).
      b_p: [1, Np]       zero-padded bias row.
    Pass param_dtype=jnp.bfloat16 to halve weight HBM traffic (the kernel keeps
    f32 accumulation); verify tolerance for your use case.
    """
    out_dim, in_dim = weight.shape
    np_ = _round_up(out_dim, 128)
    w_p = jnp.zeros((in_dim, np_), param_dtype).at[:, :out_dim].set(
        weight.T.astype(param_dtype))
    b_p = jnp.zeros((1, np_), param_dtype).at[0, :out_dim].set(
        bias.astype(param_dtype))
    return w_p, b_p


def _select_tiles(B, K, Np, param_bytes, budget):
    # Keep grid_m == 1 when possible so W is streamed from HBM exactly once.
    tm = B if B <= 512 else 512

    tn_cands = [t for t in range(min(Np, 2048), 127, -128) if Np % t == 0]
    tk_cands = [K]                       # full-K block (no x / K padding needed)
    if K % 128 == 0:
        tk_cands += [t for t in range(min(K, 2048), 127, -128)
                     if K % t == 0 and t != K]

    def footprint(tk, tn):
        # Double-buffered x / W / bias / output tiles (f32 x & output).
        return 2 * (tm * tk * 4 + tk * tn * param_bytes + tn * param_bytes
                    + tm * tn * 4)

    def pick(min_n_blocks):
        best = None
        for tk in tk_cands:
            for tn in tn_cands:
                if Np // tn < min_n_blocks:
                    continue
                if footprint(tk, tn) > budget:
                    continue
                score = (tk * tn, tn)
                if best is None or score > best[0]:
                    best = (score, (tk, tn))
        return None if best is None else best[1]

    choice = pick(1)
    if choice is None:                   # pathological shapes: smallest tiles
        choice = (tk_cands[-1], tn_cands[-1])
    tk, tn = choice

    # v7x shards the "parallel" axes over 2 TensorCores: ensure >= 2 parallel
    # blocks when the shape allows (costs nothing on 1-TC chips: identical HBM
    # traffic, one extra ~0.35us grid step).
    if pl.cdiv(B, tm) * (Np // tn) == 1 and Np >= 256:
        alt = pick(2)
        if alt is not None:
            tk, tn = alt
    return tm, tk, tn


def classifier_1_forward(x, w_p, b_p, out_dim):
    """y = x @ weight.T + bias via a tiled, pipelined Pallas matmul.

    x:   [B, in_dim] float32
    w_p: [in_dim, Np], b_p: [1, Np]   (from prepare_classifier_1_params)
    returns [B, out_dim] float32
    """
    B, K = x.shape
    Kw, Np = w_p.shape
    assert Kw == K, "weight/in_dim mismatch"

    param_bytes = jnp.dtype(w_p.dtype).itemsize
    cap = _vmem_capacity_bytes()
    tile_budget = max(16 * _MIB, cap - 24 * _MIB)   # 128MiB -> 104, 64MiB -> 40
    tm, tk, tn = _select_tiles(B, K, Np, param_bytes, tile_budget)

    grid_m = pl.cdiv(B, tm)   # ragged last M block (no x padding); any garbage
                              # rows are masked on output writeback.
    grid_n = Np // tn
    grid_k = 1 if tk == K else K // tk
    grid = (grid_m, grid_n, grid_k)

    footprint = 2 * (tm * tk * 4 + tk * tn * param_bytes + tn * param_bytes
                     + tm * tn * 4)
    vmem_limit = int(min(max(32 * _MIB, footprint + 16 * _MIB), cap - 8 * _MIB))

    cost = pl.CostEstimate(
        flops=2 * B * K * Np,
        transcendentals=0,
        bytes_accessed=(4 * B * K * grid_n                 # x re-read per N block
                        + param_bytes * K * Np * grid_m    # W re-read per M block
                        + param_bytes * Np * grid_m        # bias
                        + 4 * B * Np),                     # output
    )

    kernel = functools.partial(_linear_kernel, single_k=(grid_k == 1))

    y_full = pl.pallas_call(
        kernel,
        out_shape=jax.ShapeDtypeStruct((B, Np), jnp.float32),
        grid_spec=pltpu.PrefetchScalarGridSpec(
            num_scalar_prefetch=0,
            grid=grid,
            in_specs=[
                pl.BlockSpec((tm, tk), lambda i, j, k: (i, k)),   # x tile
                pl.BlockSpec((tk, tn), lambda i, j, k: (k, j)),   # W tile
                pl.BlockSpec((1, tn), lambda i, j, k: (0, j)),    # bias row
            ],
            out_specs=pl.BlockSpec((tm, tn), lambda i, j, k: (i, j)),
        ),
        compiler_params=pltpu.CompilerParams(
            dimension_semantics=("parallel", "parallel", "arbitrary"),
            vmem_limit_bytes=vmem_limit,
        ),
        cost_estimate=cost,
    )(x, w_p, b_p)

    # Only the lane-padded N needs slicing (M is never padded); skip when the
    # output is already lane-dense.
    return y_full if Np == out_dim else y_full[:, :out_dim]


def xavier_normal(key, out_dim, in_dim):
    # Matches torch.nn.init.xavier_normal_: std = sqrt(2 / (fan_in + fan_out))
    std = (2.0 / (in_dim + out_dim)) ** 0.5
    return std * jax.random.normal(key, (out_dim, in_dim), dtype=jnp.float32)


if __name__ == "__main__":
    key = jax.random.PRNGKey(0)
    k_x, k_w = jax.random.split(key)

    B, in_dim, out_dim = 8, 32, 16

    x = jax.random.normal(k_x, (B, in_dim), dtype=jnp.float32)
    weight = xavier_normal(k_w, out_dim, in_dim)        # [out_dim, in_dim]
    bias = jnp.zeros((out_dim,), dtype=jnp.float32)     # bias.data.fill_(0.0)

    # One-time parameter prep (transpose + lane-dense N padding), outside the
    # per-call hot path.
    w_p, b_p = prepare_classifier_1_params(weight, bias)

    y = classifier_1_forward(x, w_p, b_p, out_dim)
    y = jax.block_until_ready(y)

    # Reference check against plain-JAX linear (PyTorch nn.Linear semantics).
    y_ref = x @ weight.T + bias
    assert y.shape == (B, out_dim)
    assert jnp.allclose(y, y_ref, atol=1e-5, rtol=1e-5)

    print("KERNEL_OK")
</pallas_src>

<mosaic_0001>
module attributes {stable_mosaic.version = 11 : i64} {
  func.func @_linear_kernel(%arg0: i32, %arg1: i32, %arg2: i32, %arg3: memref<8x32xf32, #tpu.memory_space<vmem>>, %arg4: memref<32x128xf32, #tpu.memory_space<vmem>>, %arg5: memref<1x128xf32, #tpu.memory_space<vmem>>, %arg6: memref<8x128xf32, #tpu.memory_space<vmem>>) attributes {dimension_semantics = [#tpu.dimension_semantics<parallel>, #tpu.dimension_semantics<parallel>, #tpu.dimension_semantics<arbitrary>], iteration_bounds = array<i64: 1, 1, 1>, scalar_prefetch = 0 : i64, scratch_operands = 0 : i64, tpu.core_type = #tpu.core_type<tc>, window_params = [{transform_indices = @transform_0, window_bounds = array<i64: 8, 32>}, {transform_indices = @transform_1, window_bounds = array<i64: 32, 128>}, {transform_indices = @transform_2, window_bounds = array<i64: 1, 128>}, {transform_indices = @transform_3, window_bounds = array<i64: 8, 128>}]} {
    %c0 = arith.constant 0 : index
    %c0_0 = arith.constant 0 : index
    %0 = vector.load %arg3[%c0, %c0_0] : memref<8x32xf32, #tpu.memory_space<vmem>>, vector<8x32xf32>
    %c0_1 = arith.constant 0 : index
    %c0_2 = arith.constant 0 : index
    %1 = vector.load %arg4[%c0_1, %c0_2] : memref<32x128xf32, #tpu.memory_space<vmem>>, vector<32x128xf32>
    %cst = arith.constant dense<0.000000e+00> : vector<8x128xf32>
    %2 = tpu.matmul %0, %1, %cst {dimension_numbers = #tpu.dot_dimension_numbers<[1], [0], [0], [1], [0, 0, 1, 1], [], []>} : vector<8x32xf32>, vector<32x128xf32>, vector<8x128xf32> -> vector<8x128xf32>
    %c0_3 = arith.constant 0 : index
    %c0_4 = arith.constant 0 : index
    %3 = vector.load %arg5[%c0_3, %c0_4] : memref<1x128xf32, #tpu.memory_space<vmem>>, vector<1x128xf32>
    %4 = vector.broadcast %3 : vector<1x128xf32> to vector<8x128xf32>
    %5 = arith.addf %2, %4 : vector<8x128xf32>
    %c0_5 = arith.constant 0 : index
    %c0_6 = arith.constant 0 : index
    %6 = vector.load %arg6[%c0_5, %c0_6] : memref<8x128xf32, #tpu.memory_space<vmem>>, vector<8x128xf32>
    tpu.vector_store %arg6[%c0_5, %c0_6], %5 {strides = array<i32>} : memref<8x128xf32, #tpu.memory_space<vmem>>, vector<8x128xf32>,
    return
  }
  func.func @transform_0(%arg0: i32, %arg1: i32, %arg2: i32) -> (i32, i32) {
    %c0_i32 = arith.constant 0 : i32
    return %arg0, %arg2 : i32, i32
  }
  func.func @transform_1(%arg0: i32, %arg1: i32, %arg2: i32) -> (i32, i32) {
    %c0_i32 = arith.constant 0 : i32
    return %arg2, %arg1 : i32, i32
  }
  func.func @transform_2(%arg0: i32, %arg1: i32, %arg2: i32) -> (i32, i32) {
    %c0_i32 = arith.constant 0 : i32
    %c0_i32_0 = arith.constant 0 : i32
    return %c0_i32, %arg1 : i32, i32
  }
  func.func @transform_3(%arg0: i32, %arg1: i32, %arg2: i32) -> (i32, i32) {
    %c0_i32 = arith.constant 0 : i32
    return %arg0, %arg1 : i32, i32
  }
}

</mosaic_0001>

<llo_original>
// kernel: tpu_custom_call.1
$region0: #{tpu_custom_call.1}
  #allocation0 [shape = 'u32[]', space=smem, size = 0x4, offset = 0x4, fixed_abs, tag = 'smem constant byte address 0x4 - core index']
  #allocation1 [shape = 'u32[144,128]{1,0:T(1,128)}', space=vmem, size = 0x12000, scoped, tag = 'internal scratch']
  %s0 = inlined_call_operand.hbm [shape: f32[8,32], index: 0, kind: input, shape index: {}]
  %s1 = inlined_call_operand.hbm [shape: f32[32,128], index: 1, kind: input, shape index: {}]
  %s2 = inlined_call_operand.vmem [shape: f32[1,128], index: 2, kind: input, shape index: {}]
  %s3 = inlined_call_operand.hbm [shape: f32[8,128], index: 3, kind: output, shape index: {}]
  %s4 = sld [smem:[#allocation0]]
  $region30: #{tpu_custom_call.1} parent=0
    _
  %s6 = ssub.s32 1, %s4
  %s7 = scalar_select 0, %s6, %s4
  $region1: #{tpu_custom_call.1} parent=0
    #allocation2 [shape = 'u8[4096]{0}', space=vmem, size = 0x1000, scoped, tag = 'input window, operand 0, single buffered']
    #allocation3 [shape = 's32[1]{0}', space=sflag, size = 0x4, scoped, tag = 'scoped memory for tpu_custom_call.1']
    #allocation4 [shape = 's32[1]{0}', space=sflag, size = 0x4, scoped, tag = 'scoped memory for tpu_custom_call.1']
    #allocation5 [shape = 'u8[16384]{0}', space=vmem, size = 0x4000, scoped, tag = 'input window, operand 1, single buffered']
    #allocation6 [shape = 's32[1]{0}', space=sflag, size = 0x4, scoped, tag = 'scoped memory for tpu_custom_call.1']
    #allocation7 [shape = 'u8[4096]{0}', space=vmem, size = 0x1000, scoped, tag = 'output window, operand 0, single buffered']
    %8 = vsyncpa [#allocation3], 0
    %9 = vsyncpa [#allocation6], 0
    %10 = vsyncpa [#allocation4], 0
    // Predicated region
    $region2: #{tpu_custom_call.1} parent=1 // pred_check
      _
    $region3: #{tpu_custom_call.1} parent=1 // pred_check_branch
      %12 = sbr.rel (0) target = $region5
    $region4: #{tpu_custom_call.1} parent=1 // pred_region
      %s14 = ssub.s32 128, 128
      %15 = vsyncadd [#allocation3], %s14
      %s17 = sshll.u32 [#allocation2], 4
      %s18 = int_to_ptr.vmem [resolvable:$true] %s17
      %20 = dma.hbm_to_vmem [thread:$0]  %s0, 128, %s18, [#allocation3]
    $region5: #{tpu_custom_call.1} parent=1 // pred_fallthru
      _
    // Predicated region
    $region6: #{tpu_custom_call.1} parent=1 // pred_check
      _
    $region7: #{tpu_custom_call.1} parent=1 // pred_check_branch
      %22 = sbr.rel (0) target = $region9
    $region8: #{tpu_custom_call.1} parent=1 // pred_region
      %s24 = ssub.s32 512, 512
      %25 = vsyncadd [#allocation6], %s24
      %s26 = sshll.u32 [#allocation5], 4
      %s27 = int_to_ptr.vmem [resolvable:$true] %s26
      %32 = dma.hbm_to_vmem [thread:$0]  %s1, 512, %s27, [#allocation6], 128, 128, 8
    $region9: #{tpu_custom_call.1} parent=1 // pred_fallthru
      _
    // Predicated region
    $region10: #{tpu_custom_call.1} parent=1 // pred_check
      _
    $region11: #{tpu_custom_call.1} parent=1 // pred_check_branch
      %34 = sbr.rel (0) target = $region13
    $region12: #{tpu_custom_call.1} parent=1 // pred_region
      _
    $region13: #{tpu_custom_call.1} parent=1 // pred_fallthru
      _
    // Predicated region
    $region14: #{tpu_custom_call.1} parent=1 // pred_check
      _
    $region15: #{tpu_custom_call.1} parent=1 // pred_check_branch
      %36 = sbr.rel (0) target = $region17
    $region16: #{tpu_custom_call.1} parent=1 // pred_region
      %37 = dma.done [#allocation3], 128
    $region17: #{tpu_custom_call.1} parent=1 // pred_fallthru
      _
    // Predicated region
    $region18: #{tpu_custom_call.1} parent=1 // pred_check
      _
    $region19: #{tpu_custom_call.1} parent=1 // pred_check_branch
      %39 = sbr.rel (0) target = $region21
    $region20: #{tpu_custom_call.1} parent=1 // pred_region
      %40 = dma.done [#allocation6], 512
    $region21: #{tpu_custom_call.1} parent=1 // pred_fallthru
      _
    %v41 = vld [vmem:[#allocation2] sm:$0xff]
    %v42 = vld [vmem:[#allocation5] sm:$0xff]
    %v43 = vld [vmem:[#allocation5 + $0x8] sm:$0xff]
    %v44 = vld [vmem:[#allocation5 + $0x10] sm:$0xff]
    %v45 = vld [vmem:[#allocation5 + $0x18] sm:$0xff]
    %v46 = vld [vmem:[%s2] sm:$0x1]
    %v48 = vlaneseq
    %v49 = vshrl.u32 %v48, 7
    %v50 = vsub.s32 0, %v49
    %v51 = vrot.slane %v46, %v50
    %vm53 = vcmask 261120
    %v55 = vsel %vm53, %v41, 0
    %57 = vmatprep.subr.mxu0 0.0
    %58 = vmatpush1.msra.mxu0 %v42
    %59 = vmatprep.subr.mxu0 0.0
    %60 = vmatpush1.msra.mxu0 %v43
    %61 = vmatprep.subr.mxu0 0.0
    %62 = vmatpush1.msra.mxu0 %v44
    %63 = vmatprep.subr.mxu0 0.0
    %64 = vmatpush1.msra.mxu0 %v45
    %65 = vmatprep.subr.mxu0 0.0
    %66 = vmatpush1.msra.mxu0 0.0
    %67 = vmatprep.subr.mxu0 0.0
    %68 = vmatpush1.msra.mxu0 0.0
    %69 = vmatprep.subr.mxu0 0.0
    %70 = vmatpush1.msra.mxu0 0.0
    %71 = vmatprep.subr.mxu0 0.0
    %72 = vmatpush1.msra.mxu0 0.0
    %73 = vmatprep.subr.mxu0 0.0
    %74 = vmatpush1.msra.mxu0 0.0
    %75 = vmatprep.subr.mxu0 0.0
    %76 = vmatpush1.msra.mxu0 0.0
    %77 = vmatprep.subr.mxu0 0.0
    %78 = vmatpush1.msra.mxu0 0.0
    %79 = vmatprep.subr.mxu0 0.0
    %80 = vmatpush1.msra.mxu0 0.0
    %81 = vmatprep.subr.mxu0 0.0
    %82 = vmatpush1.msra.mxu0 0.0
    %83 = vmatprep.subr.mxu0 0.0
    %84 = vmatpush1.msra.mxu0 0.0
    %85 = vmatprep.subr.mxu0 0.0
    %86 = vmatpush1.msra.mxu0 0.0
    %87 = vmatprep.subr.mxu0 0.0
    %88 = vmatpush1.msra.mxu0 0.0
    %89 = vmatprep.subr.mxu0 0.0
    %90 = vmatpush1.msra.mxu0 0.0
    %91 = vmatprep.subr.mxu0 0.0
    %92 = vmatpush1.msra.mxu0 0.0
    %93 = vmatprep.subr.mxu0 0.0
    %94 = vmatpush1.msra.mxu0 0.0
    %95 = vmatprep.subr.mxu0 0.0
    %96 = vmatpush1.msra.mxu0 0.0
    %97 = vmatprep.subr.mxu0 0.0
    %98 = vmatpush1.msra.mxu0 0.0
    %99 = vmatprep.subr.mxu0 0.0
    %100 = vmatpush1.msra.mxu0 0.0
    %101 = vmatprep.subr.mxu0 0.0
    %102 = vmatpush1.msra.mxu0 0.0
    %103 = vmatprep.subr.mxu0 0.0
    %104 = vmatpush1.msra.mxu0 0.0
    %105 = vmatprep.subr.mxu0 0.0
    %106 = vmatpush1.msra.mxu0 0.0
    %107 = vmatprep.subr.mxu0 0.0
    %108 = vmatpush1.msra.mxu0 0.0
    %109 = vmatprep.subr.mxu0 0.0
    %110 = vmatpush1.msra.mxu0 0.0
    %111 = vmatprep.subr.mxu0 0.0
    %112 = vmatpush1.msra.mxu0 0.0
    %113 = vmatprep.subr.mxu0 0.0
    %114 = vmatpush1.msra.mxu0 0.0
    %115 = vmatprep.subr.mxu0 0.0
    %116 = vmatpush1.msra.mxu0 0.0
    %117 = vmatprep.subr.mxu0 0.0
    %118 = vmatpush1.msra.mxu0 0.0
    %119 = vmatprep.subr.mxu0 0.0
    %120 = vmatpush1.msra.mxu0 0.0
    %121 = vmatprep.mubr.f32.mxu0 0.0
    %122 = vmatmul.mubr.f32.gmra.mrb[0].mxu0 %v55
    %v123 = vpop.f32.mrb[0].mxu0
    %v124 = vadd.f32 %v51, %v123
    %v125 = vpop.f32.mrb[0].mxu0
    %126 = vdwg.mxu0
    %127 = vst [vmem:[#allocation7] sm:$0xff] %v124
    // Predicated region
    $region22: #{tpu_custom_call.1} parent=1 // pred_check
      _
    $region23: #{tpu_custom_call.1} parent=1 // pred_check_branch
      %129 = sbr.rel (0) target = $region25
    $region24: #{tpu_custom_call.1} parent=1 // pred_region
      %s131 = ssub.s32 128, 128
      %132 = vsyncadd [#allocation4], %s131
      %s134 = sshll.u32 [#allocation7], 4
      %s135 = int_to_ptr.vmem [resolvable:$true] %s134
      %137 = dma.vmem_to_hbm [thread:$0]  %s135, 128, %s3, [#allocation4]
    $region25: #{tpu_custom_call.1} parent=1 // pred_fallthru
      _
    // Predicated region
    $region26: #{tpu_custom_call.1} parent=1 // pred_check
      _
    $region27: #{tpu_custom_call.1} parent=1 // pred_check_branch
      %139 = sbr.rel (0) target = $region29
    $region28: #{tpu_custom_call.1} parent=1 // pred_region
      %140 = dma.done [#allocation4], 128
    $region29: #{tpu_custom_call.1} parent=1 // pred_fallthru
      _
    %141 = vsyncpa [#allocation3], 1
    %142 = vsyncpa [#allocation6], 1
    %143 = vsyncpa [#allocation4], 1

</llo_original>
